<compile_context>
chip_gen: v5e
topology: v5e:2x2
jax: 0.10.0
libtpu: 0.0.40
codegen_flags: <defaults>
</compile_context>

<pallas_src>
import jax
import jax.numpy as jnp
from jax.experimental import pallas as pl
from jax.experimental.pallas import tpu as pltpu

LANE = 128
SUBLANE = 8
OUT_SIZE = 9  # the PyTorch module hard-codes 9 in the final Linear


def _round_up(x: int, m: int) -> int:
    return (x + m - 1) // m * m


# --------------------------------------------------------------------------
# Parameters (deterministic synthetic init, PyTorch-Linear-like semantics;
# weights stored (in, out) so the kernel computes y = x @ W + b).
# --------------------------------------------------------------------------
def init_params(latent_size: int, key):
    assert latent_size % 4 == 0, "latent_size must be divisible by 4 (L/2, L/4 dims)"
    h = latent_size // 2
    q = latent_size // 4
    dims = [(latent_size, h), (h, h), (h, q), (q, OUT_SIZE)]
    params = []
    for fan_in, fan_out in dims:
        key, kw, kb = jax.random.split(key, 3)
        bound = 1.0 / float(fan_in) ** 0.5
        w = jax.random.uniform(kw, (fan_in, fan_out), jnp.float32, -bound, bound)
        b = jax.random.uniform(kb, (fan_out,), jnp.float32, -bound, bound)
        params.append((w, b))
    return params


def pack_params(params, latent_size: int):
    """Pad each layer independently to its own lane-rounded output width.

    Zero-padded columns/rows are mathematically inert through matmul / bias /
    ReLU, keep every intermediate activation lane-dense, and (unlike a single
    wmax-wide slab) waste no VMEM on the narrow later layers.
    """
    L = latent_size
    H, Q = L // 2, L // 4
    Hp = _round_up(H, LANE)
    Qp = _round_up(Q, LANE)
    Op = _round_up(OUT_SIZE, LANE)

    (w1, b1), (w2, b2), (w3, b3), (w4, b4) = params

    # TODO(synk): for bandwidth-bound deployments the frozen weights could be
    # quantized (int8 on v5e/v6e, fp8-e4m3 on v7x) with per-layer scales.
    def pad_w(w, rows, cols):
        out = jnp.zeros((rows, cols), jnp.float32)
        out = out.at[: w.shape[0], : w.shape[1]].set(w)
        return out.astype(jnp.bfloat16)

    def pad_b(b, cols):
        out = jnp.zeros((1, cols), jnp.float32)
        return out.at[0, : b.shape[0]].set(b)

    weights = (
        pad_w(w1, L, Hp),    # (L,  Hp)
        pad_w(w2, Hp, Hp),   # (Hp, Hp)
        pad_w(w3, Hp, Qp),   # (Hp, Qp)
        pad_w(w4, Qp, Op),   # (Qp, Op) -- lane-aligned N for the MXU; sliced to 9 at store
    )
    biases = (pad_b(b1, Hp), pad_b(b2, Hp), pad_b(b3, Qp), pad_b(b4, Op))
    meta = dict(L=L, Hp=Hp, Qp=Qp, Op=Op)
    return weights, biases, meta


# --------------------------------------------------------------------------
# Kernel: full 4-layer MLP on one (tb, L) batch tile. Weights/biases are
# VMEM-resident across all grid steps (constant index_map, single-buffered).
# --------------------------------------------------------------------------
def _mlp_kernel(x_ref, w1_ref, w2_ref, w3_ref, w4_ref,
                b1_ref, b2_ref, b3_ref, b4_ref, o_ref):
    bf16 = jnp.bfloat16
    f32 = jnp.float32

    # Cast to bf16 in-kernel (VPU filler; the kernel is MXU/DMA bound).
    x = x_ref[...].astype(bf16)

    h = jnp.dot(x, w1_ref[...], preferred_element_type=f32)
    h = jnp.maximum(h + b1_ref[...], 0.0)

    h = jnp.dot(h.astype(bf16), w2_ref[...], preferred_element_type=f32)
    h = jnp.maximum(h + b2_ref[...], 0.0)

    h = jnp.dot(h.astype(bf16), w3_ref[...], preferred_element_type=f32)
    h = jnp.maximum(h + b3_ref[...], 0.0)

    h = jnp.dot(h.astype(bf16), w4_ref[...], preferred_element_type=f32)
    h = h + b4_ref[...]

    # Narrow (9-lane) masked store: output writeback is 36 B/row instead of 512 B/row.
    o_ref[...] = h[:, :OUT_SIZE].astype(o_ref.dtype)


# --------------------------------------------------------------------------
# Wrapper helpers
# --------------------------------------------------------------------------
def _vmem_capacity_bytes() -> int:
    try:
        return int(pltpu.get_tpu_info().vmem_capacity_bytes)
    except Exception:
        return 64 * 1024 * 1024  # v7x per-core capacity = safe lower bound


def _default_block_batch() -> int:
    try:
        kind = jax.devices()[0].device_kind.lower()
    except Exception:
        return 512
    if "v5 lite" in kind or "v5e" in kind or "v6" in kind:
        return 1024  # 128 MiB VMEM parts: bigger tile keeps HBM roofline utilization high
    return 512       # v7x (64 MiB VMEM) and unknown chips: stay conservative


def _choose_tb(batch: int, block_batch: int) -> int:
    if batch < SUBLANE:
        return batch  # block dim == full array dim (legal, no padding needed)
    # Aim for >= 2 grid steps so both v7x TensorCores get work and the x/out
    # DMAs overlap compute; never let the block exceed the array.
    tb = min(block_batch, _round_up(pl.cdiv(batch, 2), SUBLANE))
    tb = min(tb, (batch // SUBLANE) * SUBLANE)
    return max(tb, SUBLANE)


def _resident_specs(arrays):
    """Constant-index, single-buffered BlockSpecs for VMEM-resident parameters."""
    try:
        specs = [
            pl.BlockSpec(a.shape, lambda i: (0, 0),
                         pipeline_mode=pl.Buffered(buffer_count=1))
            for a in arrays
        ]
        return specs, 1
    except (TypeError, AttributeError):
        # Older JAX without pipeline_mode: fall back to default (double) buffering.
        return [pl.BlockSpec(a.shape, lambda i: (0, 0)) for a in arrays], 2


# --------------------------------------------------------------------------
# Wrapper
# --------------------------------------------------------------------------
def latent_to_action_forward(x, weights, biases, meta, *, block_batch: int | None = None):
    """x: (batch, latent_size) -> (batch, 9), then squeeze() like the PyTorch module."""
    L, Hp, Qp, Op = meta["L"], meta["Hp"], meta["Qp"], meta["Op"]

    if x.ndim == 1:
        x = x[None, :]
    batch = x.shape[0]
    assert x.shape[1] == L, (x.shape, L)

    if block_batch is None:
        block_batch = _default_block_batch()
    tb = _choose_tb(batch, block_batch)

    w_specs, wfac = _resident_specs(weights)
    b_specs, _ = _resident_specs(biases)

    cap = _vmem_capacity_bytes()
    headroom = 6 * 1024 * 1024
    x_bytes = x.dtype.itemsize

    def footprint(t):
        w_b = wfac * sum(int(w.size) * 2 for w in weights)      # bf16 resident weights
        b_b = wfac * sum(int(b.size) * 4 for b in biases)       # f32 resident biases
        io_b = 2 * t * L * x_bytes + 2 * t * OUT_SIZE * 4        # double-buffered x / out tiles
        act_b = t * (2 * Hp + Qp + Op) * 4 + t * max(Hp, Qp) * 2  # live f32 + bf16 staging
        return w_b + b_b + io_b + act_b

    # Shrink the batch tile if the resident-weights design would not fit VMEM.
    while tb > SUBLANE and footprint(tb) > cap - headroom:
        tb = max(SUBLANE, (tb // 2) // SUBLANE * SUBLANE)
    # TODO(synk): if footprint(SUBLANE) still exceeds VMEM (very large latent_size
    # on v7x), fall back to K-tiling layer 1 via pltpu.emit_pipeline with an f32
    # accumulator while keeping layers 2-4 resident.

    vmem_limit = max(int(footprint(tb) * 1.5), 32 * 1024 * 1024)
    vmem_limit = min(vmem_limit, cap - 2 * 1024 * 1024)

    grid = (pl.cdiv(batch, tb),)

    out = pl.pallas_call(
        _mlp_kernel,
        out_shape=jax.ShapeDtypeStruct((batch, OUT_SIZE), jnp.float32),
        grid_spec=pltpu.PrefetchScalarGridSpec(
            num_scalar_prefetch=0,
            grid=grid,
            in_specs=[pl.BlockSpec((tb, L), lambda i: (i, 0))] + w_specs + b_specs,
            out_specs=pl.BlockSpec((tb, OUT_SIZE), lambda i: (i, 0)),
        ),
        compiler_params=pltpu.CompilerParams(
            dimension_semantics=("parallel",),  # megacore / 2nd TC on v7x
            vmem_limit_bytes=int(vmem_limit),
        ),
    )(x, *weights, *biases)

    # Matches PyTorch `x.squeeze()` (removes size-1 dims; no-op for batch > 1).
    return jnp.squeeze(out)


if __name__ == "__main__":
    latent_size = 32   # -> hidden dims 16, 16, 8, out 9
    batch = 2

    key = jax.random.PRNGKey(0)
    key, kx = jax.random.split(key)
    # x stands in for backbone(input).squeeze() (backbone architecture not specified).
    x = jax.random.normal(kx, (batch, latent_size), jnp.float32)

    params = init_params(latent_size, key)
    weights, biases, meta = pack_params(params, latent_size)

    y = latent_to_action_forward(x, weights, biases, meta)
    y = jax.block_until_ready(y)

    # Reference 1: true f32 PyTorch-equivalent forward.
    ref32 = x
    for i, (w, b) in enumerate(params):
        ref32 = ref32 @ w + b.reshape(1, -1)
        if i < len(params) - 1:
            ref32 = jnp.maximum(ref32, 0.0)
    ref32 = jnp.squeeze(ref32)

    # Reference 2: mirrors the kernel's bf16-in / f32-accumulate numerics exactly.
    ref16 = x
    for i, (w, b) in enumerate(params):
        ref16 = jnp.dot(ref16.astype(jnp.bfloat16), w.astype(jnp.bfloat16),
                        preferred_element_type=jnp.float32) + b.reshape(1, -1)
        if i < len(params) - 1:
            ref16 = jnp.maximum(ref16, 0.0)
    ref16 = jnp.squeeze(ref16)

    assert y.shape == (batch, OUT_SIZE), y.shape
    assert jnp.allclose(y, ref16, atol=2e-3, rtol=2e-3), \
        float(jnp.max(jnp.abs(y - ref16)))
    assert jnp.allclose(y, ref32, atol=5e-2, rtol=5e-2), \
        float(jnp.max(jnp.abs(y - ref32)))
    print("KERNEL_OK")
</pallas_src>

<mosaic_0001>
module attributes {stable_mosaic.version = 11 : i64} {
  func.func @_mlp_kernel(%arg0: i32, %arg1: memref<2x32xf32, #tpu.memory_space<vmem>>, %arg2: memref<32x128xbf16, #tpu.memory_space<vmem>>, %arg3: memref<128x128xbf16, #tpu.memory_space<vmem>>, %arg4: memref<128x128xbf16, #tpu.memory_space<vmem>>, %arg5: memref<128x128xbf16, #tpu.memory_space<vmem>>, %arg6: memref<1x128xf32, #tpu.memory_space<vmem>>, %arg7: memref<1x128xf32, #tpu.memory_space<vmem>>, %arg8: memref<1x128xf32, #tpu.memory_space<vmem>>, %arg9: memref<1x128xf32, #tpu.memory_space<vmem>>, %arg10: memref<2x9xf32, #tpu.memory_space<vmem>>) attributes {dimension_semantics = [#tpu.dimension_semantics<parallel>], iteration_bounds = array<i64: 1>, scalar_prefetch = 0 : i64, scratch_operands = 0 : i64, tpu.core_type = #tpu.core_type<tc>, window_params = [{transform_indices = @transform_0, window_bounds = array<i64: 2, 32>}, {pipeline_mode = #tpu.pipeline_mode<synchronous>, transform_indices = @transform_1, window_bounds = array<i64: 32, 128>}, {pipeline_mode = #tpu.pipeline_mode<synchronous>, transform_indices = @transform_2, window_bounds = array<i64: 128, 128>}, {pipeline_mode = #tpu.pipeline_mode<synchronous>, transform_indices = @transform_3, window_bounds = array<i64: 128, 128>}, {pipeline_mode = #tpu.pipeline_mode<synchronous>, transform_indices = @transform_4, window_bounds = array<i64: 128, 128>}, {pipeline_mode = #tpu.pipeline_mode<synchronous>, transform_indices = @transform_5, window_bounds = array<i64: 1, 128>}, {pipeline_mode = #tpu.pipeline_mode<synchronous>, transform_indices = @transform_6, window_bounds = array<i64: 1, 128>}, {pipeline_mode = #tpu.pipeline_mode<synchronous>, transform_indices = @transform_7, window_bounds = array<i64: 1, 128>}, {pipeline_mode = #tpu.pipeline_mode<synchronous>, transform_indices = @transform_8, window_bounds = array<i64: 1, 128>}, {transform_indices = @transform_9, window_bounds = array<i64: 2, 9>}]} {
    %c0 = arith.constant 0 : index
    %c0_0 = arith.constant 0 : index
    %0 = vector.load %arg1[%c0, %c0_0] : memref<2x32xf32, #tpu.memory_space<vmem>>, vector<2x32xf32>
    %1 = arith.truncf %0 : vector<2x32xf32> to vector<2x32xbf16>
    %c0_1 = arith.constant 0 : index
    %c0_2 = arith.constant 0 : index
    %2 = vector.load %arg2[%c0_1, %c0_2] : memref<32x128xbf16, #tpu.memory_space<vmem>>, vector<32x128xbf16>
    %cst = arith.constant dense<0.000000e+00> : vector<2x128xf32>
    %3 = tpu.matmul %1, %2, %cst {dimension_numbers = #tpu.dot_dimension_numbers<[1], [0], [0], [1], [0, 0, 1, 1], [], []>} : vector<2x32xbf16>, vector<32x128xbf16>, vector<2x128xf32> -> vector<2x128xf32>
    %c0_3 = arith.constant 0 : index
    %c0_4 = arith.constant 0 : index
    %4 = vector.load %arg6[%c0_3, %c0_4] : memref<1x128xf32, #tpu.memory_space<vmem>>, vector<1x128xf32>
    %5 = vector.broadcast %4 : vector<1x128xf32> to vector<2x128xf32>
    %6 = arith.addf %3, %5 : vector<2x128xf32>
    %cst_5 = arith.constant 0.000000e+00 : f32
    %7 = vector.broadcast %cst_5 : f32 to vector<2x128xf32>
    %8 = arith.maximumf %6, %7 : vector<2x128xf32>
    %9 = arith.truncf %8 : vector<2x128xf32> to vector<2x128xbf16>
    %c0_6 = arith.constant 0 : index
    %c0_7 = arith.constant 0 : index
    %10 = vector.load %arg3[%c0_6, %c0_7] : memref<128x128xbf16, #tpu.memory_space<vmem>>, vector<128x128xbf16>
    %cst_8 = arith.constant dense<0.000000e+00> : vector<2x128xf32>
    %11 = tpu.matmul %9, %10, %cst_8 {dimension_numbers = #tpu.dot_dimension_numbers<[1], [0], [0], [1], [0, 0, 1, 1], [], []>} : vector<2x128xbf16>, vector<128x128xbf16>, vector<2x128xf32> -> vector<2x128xf32>
    %c0_9 = arith.constant 0 : index
    %c0_10 = arith.constant 0 : index
    %12 = vector.load %arg7[%c0_9, %c0_10] : memref<1x128xf32, #tpu.memory_space<vmem>>, vector<1x128xf32>
    %13 = vector.broadcast %12 : vector<1x128xf32> to vector<2x128xf32>
    %14 = arith.addf %11, %13 : vector<2x128xf32>
    %cst_11 = arith.constant 0.000000e+00 : f32
    %15 = vector.broadcast %cst_11 : f32 to vector<2x128xf32>
    %16 = arith.maximumf %14, %15 : vector<2x128xf32>
    %17 = arith.truncf %16 : vector<2x128xf32> to vector<2x128xbf16>
    %c0_12 = arith.constant 0 : index
    %c0_13 = arith.constant 0 : index
    %18 = vector.load %arg4[%c0_12, %c0_13] : memref<128x128xbf16, #tpu.memory_space<vmem>>, vector<128x128xbf16>
    %cst_14 = arith.constant dense<0.000000e+00> : vector<2x128xf32>
    %19 = tpu.matmul %17, %18, %cst_14 {dimension_numbers = #tpu.dot_dimension_numbers<[1], [0], [0], [1], [0, 0, 1, 1], [], []>} : vector<2x128xbf16>, vector<128x128xbf16>, vector<2x128xf32> -> vector<2x128xf32>
    %c0_15 = arith.constant 0 : index
    %c0_16 = arith.constant 0 : index
    %20 = vector.load %arg8[%c0_15, %c0_16] : memref<1x128xf32, #tpu.memory_space<vmem>>, vector<1x128xf32>
    %21 = vector.broadcast %20 : vector<1x128xf32> to vector<2x128xf32>
    %22 = arith.addf %19, %21 : vector<2x128xf32>
    %cst_17 = arith.constant 0.000000e+00 : f32
    %23 = vector.broadcast %cst_17 : f32 to vector<2x128xf32>
    %24 = arith.maximumf %22, %23 : vector<2x128xf32>
    %25 = arith.truncf %24 : vector<2x128xf32> to vector<2x128xbf16>
    %c0_18 = arith.constant 0 : index
    %c0_19 = arith.constant 0 : index
    %26 = vector.load %arg5[%c0_18, %c0_19] : memref<128x128xbf16, #tpu.memory_space<vmem>>, vector<128x128xbf16>
    %cst_20 = arith.constant dense<0.000000e+00> : vector<2x128xf32>
    %27 = tpu.matmul %25, %26, %cst_20 {dimension_numbers = #tpu.dot_dimension_numbers<[1], [0], [0], [1], [0, 0, 1, 1], [], []>} : vector<2x128xbf16>, vector<128x128xbf16>, vector<2x128xf32> -> vector<2x128xf32>
    %c0_21 = arith.constant 0 : index
    %c0_22 = arith.constant 0 : index
    %28 = vector.load %arg9[%c0_21, %c0_22] : memref<1x128xf32, #tpu.memory_space<vmem>>, vector<1x128xf32>
    %29 = vector.broadcast %28 : vector<1x128xf32> to vector<2x128xf32>
    %30 = arith.addf %27, %29 : vector<2x128xf32>
    %31 = vector.extract_strided_slice %30 {offsets = [0, 0], sizes = [2, 9], strides = [1, 1]} : vector<2x128xf32> to vector<2x9xf32>
    %c0_23 = arith.constant 0 : index
    %c0_24 = arith.constant 0 : index
    %32 = vector.load %arg10[%c0_23, %c0_24] : memref<2x9xf32, #tpu.memory_space<vmem>>, vector<2x9xf32>
    tpu.vector_store %arg10[%c0_23, %c0_24], %31 {strides = array<i32>} : memref<2x9xf32, #tpu.memory_space<vmem>>, vector<2x9xf32>,
    return
  }
  func.func @transform_0(%arg0: i32) -> (i32, i32) {
    %c0_i32 = arith.constant 0 : i32
    %c0_i32_0 = arith.constant 0 : i32
    return %arg0, %c0_i32 : i32, i32
  }
  func.func @transform_1(%arg0: i32) -> (i32, i32) {
    %c0_i32 = arith.constant 0 : i32
    %c0_i32_0 = arith.constant 0 : i32
    %c0_i32_1 = arith.constant 0 : i32
    return %c0_i32, %c0_i32_0 : i32, i32
  }
  func.func @transform_2(%arg0: i32) -> (i32, i32) {
    %c0_i32 = arith.constant 0 : i32
    %c0_i32_0 = arith.constant 0 : i32
    %c0_i32_1 = arith.constant 0 : i32
    return %c0_i32, %c0_i32_0 : i32, i32
  }
  func.func @transform_3(%arg0: i32) -> (i32, i32) {
    %c0_i32 = arith.constant 0 : i32
    %c0_i32_0 = arith.constant 0 : i32
    %c0_i32_1 = arith.constant 0 : i32
    return %c0_i32, %c0_i32_0 : i32, i32
  }
  func.func @transform_4(%arg0: i32) -> (i32, i32) {
    %c0_i32 = arith.constant 0 : i32
    %c0_i32_0 = arith.constant 0 : i32
    %c0_i32_1 = arith.constant 0 : i32
    return %c0_i32, %c0_i32_0 : i32, i32
  }
  func.func @transform_5(%arg0: i32) -> (i32, i32) {
    %c0_i32 = arith.constant 0 : i32
    %c0_i32_0 = arith.constant 0 : i32
    %c0_i32_1 = arith.constant 0 : i32
    return %c0_i32, %c0_i32_0 : i32, i32
  }
  func.func @transform_6(%arg0: i32) -> (i32, i32) {
    %c0_i32 = arith.constant 0 : i32
    %c0_i32_0 = arith.constant 0 : i32
    %c0_i32_1 = arith.constant 0 : i32
    return %c0_i32, %c0_i32_0 : i32, i32
  }
  func.func @transform_7(%arg0: i32) -> (i32, i32) {
    %c0_i32 = arith.constant 0 : i32
    %c0_i32_0 = arith.constant 0 : i32
    %c0_i32_1 = arith.constant 0 : i32
    return %c0_i32, %c0_i32_0 : i32, i32
  }
  func.func @transform_8(%arg0: i32) -> (i32, i32) {
    %c0_i32 = arith.constant 0 : i32
    %c0_i32_0 = arith.constant 0 : i32
    %c0_i32_1 = arith.constant 0 : i32
    return %c0_i32, %c0_i32_0 : i32, i32
  }
  func.func @transform_9(%arg0: i32) -> (i32, i32) {
    %c0_i32 = arith.constant 0 : i32
    %c0_i32_0 = arith.constant 0 : i32
    return %arg0, %c0_i32 : i32, i32
  }
}

</mosaic_0001>

<llo_original>
// kernel: tpu_custom_call.1
$region0: #{tpu_custom_call.1}
  #allocation0 [shape = 'u32[]', space=smem, size = 0x4, offset = 0x4, fixed_abs, tag = 'smem constant byte address 0x4 - core index']
  #allocation1 [shape = 'u32[72,128]{1,0:T(1,128)}', space=vmem, size = 0x9000, scoped, tag = 'internal scratch']
  %s0 = inlined_call_operand.hbm [shape: f32[2,32], index: 0, kind: input, shape index: {}]
  %s1 = inlined_call_operand.hbm [shape: bf16[32,128], index: 1, kind: input, shape index: {}]
  %s2 = inlined_call_operand.hbm [shape: bf16[128,128], index: 2, kind: input, shape index: {}]
  %s3 = inlined_call_operand.hbm [shape: bf16[128,128], index: 3, kind: input, shape index: {}]
  %s4 = inlined_call_operand.hbm [shape: bf16[128,128], index: 4, kind: input, shape index: {}]
  %s5 = inlined_call_operand.vmem [shape: f32[1,128], index: 5, kind: input, shape index: {}]
  %s6 = inlined_call_operand.vmem [shape: f32[1,128], index: 6, kind: input, shape index: {}]
  %s7 = inlined_call_operand.vmem [shape: f32[1,128], index: 7, kind: input, shape index: {}]
  %s8 = inlined_call_operand.vmem [shape: f32[1,128], index: 8, kind: input, shape index: {}]
  %s9 = inlined_call_operand.hbm [shape: f32[2,9], index: 9, kind: output, shape index: {}]
  %s10 = sld [smem:[#allocation0]]
  $region66: #{tpu_custom_call.1} parent=0
    _
  %s12 = ssub.s32 1, %s10
  %s13 = scalar_select 0, %s12, %s10
  $region1: #{tpu_custom_call.1} parent=0
    #allocation2 [shape = 'u8[1024]{0}', space=vmem, size = 0x400, scoped, tag = 'input window, operand 0, single buffered']
    #allocation3 [shape = 's32[1]{0}', space=sflag, size = 0x4, scoped, tag = 'scoped memory for tpu_custom_call.1']
    #allocation4 [shape = 's32[1]{0}', space=sflag, size = 0x4, scoped, tag = 'scoped memory for tpu_custom_call.1']
    #allocation5 [shape = 'u8[8192]{0}', space=vmem, size = 0x2000, scoped, tag = 'input window, operand 1, single buffered']
    #allocation6 [shape = 's32[1]{0}', space=sflag, size = 0x4, scoped, tag = 'scoped memory for tpu_custom_call.1']
    #allocation7 [shape = 'u8[32768]{0}', space=vmem, size = 0x8000, scoped, tag = 'input window, operand 2, single buffered']
    #allocation8 [shape = 'u8[32768]{0}', space=vmem, size = 0x8000, scoped, tag = 'input window, operand 3, single buffered']
    #allocation9 [shape = 's32[1]{0}', space=sflag, size = 0x4, scoped, tag = 'scoped memory for tpu_custom_call.1']
    #allocation10 [shape = 'u8[32768]{0}', space=vmem, size = 0x8000, scoped, tag = 'input window, operand 4, single buffered']
    #allocation11 [shape = 'u8[1024]{0}', space=vmem, size = 0x400, scoped, tag = 'output window, operand 0, single buffered']
    %14 = vsyncpa [#allocation3], 0
    %15 = vsyncpa [#allocation6], 0
    %16 = vsyncpa [#allocation9], 0
    %17 = vsyncpa [#allocation4], 0
    // Predicated region
    $region2: #{tpu_custom_call.1} parent=1 // pred_check
      _
    $region3: #{tpu_custom_call.1} parent=1 // pred_check_branch
      %19 = sbr.rel (0) target = $region5
    $region4: #{tpu_custom_call.1} parent=1 // pred_region
      %21 = vsyncadd [#allocation3], 0
      %s23 = sshll.u32 %s0, 4
      %s24 = int_to_ptr.hbm [resolvable:$true] %s23
      %s25 = sshll.u32 [#allocation2], 4
      %s26 = int_to_ptr.vmem [resolvable:$true] %s25
      %28 = dma.hbm_to_vmem [thread:$0]  %s24, 32, %s26, [#allocation3]
    $region5: #{tpu_custom_call.1} parent=1 // pred_fallthru
      _
    // Predicated region
    $region6: #{tpu_custom_call.1} parent=1 // pred_check
      _
    $region7: #{tpu_custom_call.1} parent=1 // pred_check_branch
      %30 = sbr.rel (0) target = $region9
    $region8: #{tpu_custom_call.1} parent=1 // pred_region
      %32 = vsyncadd [#allocation6], 0
      %s33 = sshll.u32 %s1, 4
      %s34 = int_to_ptr.hbm [resolvable:$true] %s33
      %s35 = sshll.u32 [#allocation5], 4
      %s36 = int_to_ptr.vmem [resolvable:$true] %s35
      %41 = dma.hbm_to_vmem [thread:$0]  %s34, 256, %s36, [#allocation6], 64, 64, 4
    $region9: #{tpu_custom_call.1} parent=1 // pred_fallthru
      _
    // Predicated region
    $region10: #{tpu_custom_call.1} parent=1 // pred_check
      _
    $region11: #{tpu_custom_call.1} parent=1 // pred_check_branch
      %43 = sbr.rel (0) target = $region13
    $region12: #{tpu_custom_call.1} parent=1 // pred_region
      %45 = vsyncadd [#allocation6], 0
      %s46 = sshll.u32 %s2, 4
      %s47 = int_to_ptr.hbm [resolvable:$true] %s46
      %s48 = sshll.u32 [#allocation7], 4
      %s49 = int_to_ptr.vmem [resolvable:$true] %s48
      %54 = dma.hbm_to_vmem [thread:$0]  %s47, 1024, %s49, [#allocation6], 64, 64, 4
    $region13: #{tpu_custom_call.1} parent=1 // pred_fallthru
      _
    // Predicated region
    $region14: #{tpu_custom_call.1} parent=1 // pred_check
      _
    $region15: #{tpu_custom_call.1} parent=1 // pred_check_branch
      %56 = sbr.rel (0) target = $region17
    $region16: #{tpu_custom_call.1} parent=1 // pred_region
      %58 = vsyncadd [#allocation9], 0
      %s59 = sshll.u32 %s3, 4
      %s60 = int_to_ptr.hbm [resolvable:$true] %s59
      %s61 = sshll.u32 [#allocation8], 4
      %s62 = int_to_ptr.vmem [resolvable:$true] %s61
      %67 = dma.hbm_to_vmem [thread:$0]  %s60, 1024, %s62, [#allocation9], 64, 64, 4
    $region17: #{tpu_custom_call.1} parent=1 // pred_fallthru
      _
    // Predicated region
    $region18: #{tpu_custom_call.1} parent=1 // pred_check
      _
    $region19: #{tpu_custom_call.1} parent=1 // pred_check_branch
      %69 = sbr.rel (0) target = $region21
    $region20: #{tpu_custom_call.1} parent=1 // pred_region
      %71 = vsyncadd [#allocation9], 0
      %s72 = sshll.u32 %s4, 4
      %s73 = int_to_ptr.hbm [resolvable:$true] %s72
      %s74 = sshll.u32 [#allocation10], 4
      %s75 = int_to_ptr.vmem [resolvable:$true] %s74
      %80 = dma.hbm_to_vmem [thread:$0]  %s73, 1024, %s75, [#allocation9], 64, 64, 4
    $region21: #{tpu_custom_call.1} parent=1 // pred_fallthru
      _
    // Predicated region
    $region22: #{tpu_custom_call.1} parent=1 // pred_check
      _
    $region23: #{tpu_custom_call.1} parent=1 // pred_check_branch
      %82 = sbr.rel (0) target = $region25
    $region24: #{tpu_custom_call.1} parent=1 // pred_region
      _
    $region25: #{tpu_custom_call.1} parent=1 // pred_fallthru
      _
    // Predicated region
    $region26: #{tpu_custom_call.1} parent=1 // pred_check
      _
    $region27: #{tpu_custom_call.1} parent=1 // pred_check_branch
      %84 = sbr.rel (0) target = $region29
    $region28: #{tpu_custom_call.1} parent=1 // pred_region
      _
    $region29: #{tpu_custom_call.1} parent=1 // pred_fallthru
      _
    // Predicated region
    $region30: #{tpu_custom_call.1} parent=1 // pred_check
      _
    $region31: #{tpu_custom_call.1} parent=1 // pred_check_branch
      %86 = sbr.rel (0) target = $region33
    $region32: #{tpu_custom_call.1} parent=1 // pred_region
      _
    $region33: #{tpu_custom_call.1} parent=1 // pred_fallthru
      _
    // Predicated region
    $region34: #{tpu_custom_call.1} parent=1 // pred_check
      _
    $region35: #{tpu_custom_call.1} parent=1 // pred_check_branch
      %88 = sbr.rel (0) target = $region37
    $region36: #{tpu_custom_call.1} parent=1 // pred_region
      _
    $region37: #{tpu_custom_call.1} parent=1 // pred_fallthru
      _
    // Predicated region
    $region38: #{tpu_custom_call.1} parent=1 // pred_check
      _
    $region39: #{tpu_custom_call.1} parent=1 // pred_check_branch
      %90 = sbr.rel (0) target = $region41
    $region40: #{tpu_custom_call.1} parent=1 // pred_region
      %92 = dma.done [#allocation3], 32
    $region41: #{tpu_custom_call.1} parent=1 // pred_fallthru
      _
    // Predicated region
    $region42: #{tpu_custom_call.1} parent=1 // pred_check
      _
    $region43: #{tpu_custom_call.1} parent=1 // pred_check_branch
      %94 = sbr.rel (0) target = $region45
    $region44: #{tpu_custom_call.1} parent=1 // pred_region
      %96 = dma.done [#allocation6], 256
    $region45: #{tpu_custom_call.1} parent=1 // pred_fallthru
      _
    // Predicated region
    $region46: #{tpu_custom_call.1} parent=1 // pred_check
      _
    $region47: #{tpu_custom_call.1} parent=1 // pred_check_branch
      %98 = sbr.rel (0) target = $region49
    $region48: #{tpu_custom_call.1} parent=1 // pred_region
      %100 = dma.done [#allocation6], 1024
    $region49: #{tpu_custom_call.1} parent=1 // pred_fallthru
      _
    // Predicated region
    $region50: #{tpu_custom_call.1} parent=1 // pred_check
      _
    $region51: #{tpu_custom_call.1} parent=1 // pred_check_branch
      %102 = sbr.rel (0) target = $region53
    $region52: #{tpu_custom_call.1} parent=1 // pred_region
      %104 = dma.done [#allocation9], 1024
    $region53: #{tpu_custom_call.1} parent=1 // pred_fallthru
      _
    // Predicated region
    $region54: #{tpu_custom_call.1} parent=1 // pred_check
      _
    $region55: #{tpu_custom_call.1} parent=1 // pred_check_branch
      %106 = sbr.rel (0) target = $region57
    $region56: #{tpu_custom_call.1} parent=1 // pred_region
      %108 = dma.done [#allocation9], 1024
    $region57: #{tpu_custom_call.1} parent=1 // pred_fallthru
      _
    %v110 = vld [vmem:[#allocation2] sm:$0x3]
    %v111 = vpack.c.bf16 %v110, %v110
    %v112 = vld [vmem:[#allocation5] sm:$0xf]
    %v113 = vld [vmem:[#allocation5 + $0x4] sm:$0xf]
    %v114 = vld [vmem:[#allocation5 + $0x8] sm:$0xf]
    %v115 = vld [vmem:[#allocation5 + $0xc] sm:$0xf]
    %v116 = vld [vmem:[%s5] sm:$0x1]
    %v118 = vperm.slane %v116, 0
    %v124 = vunpack.c.l.b16 %v112
    %v125 = vunpack.c.l.b16 %v113
    %v126 = vunpack.c.l.b16 %v114
    %v127 = vunpack.c.l.b16 %v115
    %v128 = vpack.c.b16 %v125, %v124
    %v129 = vpack.c.b16 %v127, %v126
    %vm132 = vcmask 261120
    %v134 = vsel %vm132, %v111, 0
    %136 = vmatpush.bf16.msra.mxu0 0
    %137 = vmatpush.bf16.msra.mxu0 0
    %138 = vmatpush.bf16.msra.mxu0 0
    %139 = vmatpush.bf16.msra.mxu0 0
    %140 = vmatpush.bf16.msra.mxu0 0
    %141 = vmatpush.bf16.msra.mxu0 0
    %142 = vmatpush.bf16.msra.mxu0 %v129
    %143 = vmatpush.bf16.msra.mxu0 %v128
    %144 = vmatmul.bf16.gmra.mxu0 %v134
    %v145 = vpop.f32.mrf.mxu0
    %v146 = vadd.f32 %v118, %v145
    %v147 = vpop.f32.mrf.mxu0
    %148 = vdwg.mxu0
    %v149 = vmax.f32 %v146, 0.0
    %v150 = vpack.c.bf16 %v149, %v149
    %v151 = vld [vmem:[#allocation7] sm:$0xf]
    %v152 = vld [vmem:[#allocation7 + $0x4] sm:$0xf]
    %v153 = vld [vmem:[#allocation7 + $0x8] sm:$0xf]
    %v154 = vld [vmem:[#allocation7 + $0xc] sm:$0xf]
    %v155 = vld [vmem:[#allocation7 + $0x10] sm:$0xf]
    %v156 = vld [vmem:[#allocation7 + $0x14] sm:$0xf]
    %v157 = vld [vmem:[#allocation7 + $0x18] sm:$0xf]
    %v158 = vld [vmem:[#allocation7 + $0x1c] sm:$0xf]
    %v159 = vld [vmem:[#allocation7 + $0x20] sm:$0xf]
    %v160 = vld [vmem:[#allocation7 + $0x24] sm:$0xf]
    %v161 = vld [vmem:[#allocation7 + $0x28] sm:$0xf]
    %v162 = vld [vmem:[#allocation7 + $0x2c] sm:$0xf]
    %v163 = vld [vmem:[#allocation7 + $0x30] sm:$0xf]
    %v164 = vld [vmem:[#allocation7 + $0x34] sm:$0xf]
    %v165 = vld [vmem:[#allocation7 + $0x38] sm:$0xf]
    %v166 = vld [vmem:[#allocation7 + $0x3c] sm:$0xf]
    %v167 = vld [vmem:[%s6] sm:$0x1]
    %v169 = vperm.slane %v167, 0
    %v187 = vunpack.c.l.b16 %v151
    %v188 = vunpack.c.l.b16 %v152
    %v189 = vunpack.c.l.b16 %v153
    %v190 = vunpack.c.l.b16 %v154
    %v191 = vunpack.c.l.b16 %v155
    %v192 = vunpack.c.l.b16 %v156
    %v193 = vunpack.c.l.b16 %v157
    %v194 = vunpack.c.l.b16 %v158
    %v195 = vunpack.c.l.b16 %v159
    %v196 = vunpack.c.l.b16 %v160
    %v197 = vunpack.c.l.b16 %v161
    %v198 = vunpack.c.l.b16 %v162
    %v199 = vunpack.c.l.b16 %v163
    %v200 = vunpack.c.l.b16 %v164
    %v201 = vunpack.c.l.b16 %v165
    %v202 = vunpack.c.l.b16 %v166
    %v203 = vpack.c.b16 %v188, %v187
    %v204 = vpack.c.b16 %v190, %v189
    %v205 = vpack.c.b16 %v192, %v191
    %v206 = vpack.c.b16 %v194, %v193
    %v207 = vpack.c.b16 %v196, %v195
    %v208 = vpack.c.b16 %v198, %v197
    %v209 = vpack.c.b16 %v200, %v199
    %v210 = vpack.c.b16 %v202, %v201
    %219 = vmatpush.bf16.msra.mxu0 %v210
    %220 = vmatpush.bf16.msra.mxu0 %v209
    %221 = vmatpush.bf16.msra.mxu0 %v208
    %222 = vmatpush.bf16.msra.mxu0 %v207
    %223 = vmatpush.bf16.msra.mxu0 %v206
    %224 = vmatpush.bf16.msra.mxu0 %v205
    %225 = vmatpush.bf16.msra.mxu0 %v204
    %226 = vmatpush.bf16.msra.mxu0 %v203
    %227 = vmatmul.bf16.gmra.mxu0 %v150
    %v228 = vpop.f32.mrf.mxu0
    %v229 = vadd.f32 %v169, %v228
    %v230 = vpop.f32.mrf.mxu0
    %231 = vdwg.mxu0
    %v232 = vmax.f32 %v229, 0.0
    %v233 = vpack.c.bf16 %v232, %v232
    %v234 = vld [vmem:[#allocation8] sm:$0xf]
    %v235 = vld [vmem:[#allocation8 + $0x4] sm:$0xf]
    %v236 = vld [vmem:[#allocation8 + $0x8] sm:$0xf]
    %v237 = vld [vmem:[#allocation8 + $0xc] sm:$0xf]
    %v238 = vld [vmem:[#allocation8 + $0x10] sm:$0xf]
    %v239 = vld [vmem:[#allocation8 + $0x14] sm:$0xf]
    %v240 = vld [vmem:[#allocation8 + $0x18] sm:$0xf]
    %v241 = vld [vmem:[#allocation8 + $0x1c] sm:$0xf]
    %v242 = vld [vmem:[#allocation8 + $0x20] sm:$0xf]
    %v243 = vld [vmem:[#allocation8 + $0x24] sm:$0xf]
    %v244 = vld [vmem:[#allocation8 + $0x28] sm:$0xf]
    %v245 = vld [vmem:[#allocation8 + $0x2c] sm:$0xf]
    %v246 = vld [vmem:[#allocation8 + $0x30] sm:$0xf]
    %v247 = vld [vmem:[#allocation8 + $0x34] sm:$0xf]
    %v248 = vld [vmem:[#allocation8 + $0x38] sm:$0xf]
    %v249 = vld [vmem:[#allocation8 + $0x3c] sm:$0xf]
    %v250 = vld [vmem:[%s7] sm:$0x1]
    %v252 = vperm.slane %v250, 0
    %v270 = vunpack.c.l.b16 %v234
    %v271 = vunpack.c.l.b16 %v235
    %v272 = vunpack.c.l.b16 %v236
    %v273 = vunpack.c.l.b16 %v237
    %v274 = vunpack.c.l.b16 %v238
    %v275 = vunpack.c.l.b16 %v239
    %v276 = vunpack.c.l.b16 %v240
    %v277 = vunpack.c.l.b16 %v241
    %v278 = vunpack.c.l.b16 %v242
    %v279 = vunpack.c.l.b16 %v243
    %v280 = vunpack.c.l.b16 %v244
    %v281 = vunpack.c.l.b16 %v245
    %v282 = vunpack.c.l.b16 %v246
    %v283 = vunpack.c.l.b16 %v247
    %v284 = vunpack.c.l.b16 %v248
    %v285 = vunpack.c.l.b16 %v249
    %v286 = vpack.c.b16 %v271, %v270
    %v287 = vpack.c.b16 %v273, %v272
    %v288 = vpack.c.b16 %v275, %v274
    %v289 = vpack.c.b16 %v277, %v276
    %v290 = vpack.c.b16 %v279, %v278
    %v291 = vpack.c.b16 %v281, %v280
    %v292 = vpack.c.b16 %v283, %v282
    %v293 = vpack.c.b16 %v285, %v284
    %302 = vmatpush.bf16.msra.mxu0 %v293
    %303 = vmatpush.bf16.msra.mxu0 %v292
    %304 = vmatpush.bf16.msra.mxu0 %v291
    %305 = vmatpush.bf16.msra.mxu0 %v290
    %306 = vmatpush.bf16.msra.mxu0 %v289
    %307 = vmatpush.bf16.msra.mxu0 %v288
    %308 = vmatpush.bf16.msra.mxu0 %v287
    %309 = vmatpush.bf16.msra.mxu0 %v286
    %310 = vmatmul.bf16.gmra.mxu0 %v233
    %v311 = vpop.f32.mrf.mxu0
    %v312 = vadd.f32 %v252, %v311
    %v313 = vpop.f32.mrf.mxu0
    %314 = vdwg.mxu0
    %v315 = vmax.f32 %v312, 0.0
    %v316 = vpack.c.bf16 %v315, %v315
    %v317 = vld [vmem:[#allocation10] sm:$0xf]
    %v318 = vld [vmem:[#allocation10 + $0x4] sm:$0xf]
    %v319 = vld [vmem:[#allocation10 + $0x8] sm:$0xf]
    %v320 = vld [vmem:[#allocation10 + $0xc] sm:$0xf]
    %v321 = vld [vmem:[#allocation10 + $0x10] sm:$0xf]
    %v322 = vld [vmem:[#allocation10 + $0x14] sm:$0xf]
    %v323 = vld [vmem:[#allocation10 + $0x18] sm:$0xf]
    %v324 = vld [vmem:[#allocation10 + $0x1c] sm:$0xf]
    %v325 = vld [vmem:[#allocation10 + $0x20] sm:$0xf]
    %v326 = vld [vmem:[#allocation10 + $0x24] sm:$0xf]
    %v327 = vld [vmem:[#allocation10 + $0x28] sm:$0xf]
    %v328 = vld [vmem:[#allocation10 + $0x2c] sm:$0xf]
    %v329 = vld [vmem:[#allocation10 + $0x30] sm:$0xf]
    %v330 = vld [vmem:[#allocation10 + $0x34] sm:$0xf]
    %v331 = vld [vmem:[#allocation10 + $0x38] sm:$0xf]
    %v332 = vld [vmem:[#allocation10 + $0x3c] sm:$0xf]
    %v333 = vld [vmem:[%s8] sm:$0x1]
    %v335 = vperm.slane %v333, 0
    %v353 = vunpack.c.l.b16 %v317
    %v354 = vunpack.c.l.b16 %v318
    %v355 = vunpack.c.l.b16 %v319
    %v356 = vunpack.c.l.b16 %v320
    %v357 = vunpack.c.l.b16 %v321
    %v358 = vunpack.c.l.b16 %v322
    %v359 = vunpack.c.l.b16 %v323
    %v360 = vunpack.c.l.b16 %v324
    %v361 = vunpack.c.l.b16 %v325
    %v362 = vunpack.c.l.b16 %v326
    %v363 = vunpack.c.l.b16 %v327
    %v364 = vunpack.c.l.b16 %v328
    %v365 = vunpack.c.l.b16 %v329
    %v366 = vunpack.c.l.b16 %v330
    %v367 = vunpack.c.l.b16 %v331
    %v368 = vunpack.c.l.b16 %v332
    %v369 = vpack.c.b16 %v354, %v353
    %v370 = vpack.c.b16 %v356, %v355
    %v371 = vpack.c.b16 %v358, %v357
    %v372 = vpack.c.b16 %v360, %v359
    %v373 = vpack.c.b16 %v362, %v361
    %v374 = vpack.c.b16 %v364, %v363
    %v375 = vpack.c.b16 %v366, %v365
    %v376 = vpack.c.b16 %v368, %v367
    %385 = vmatpush.bf16.msra.mxu0 %v376
    %386 = vmatpush.bf16.msra.mxu0 %v375
    %387 = vmatpush.bf16.msra.mxu0 %v374
    %388 = vmatpush.bf16.msra.mxu0 %v373
    %389 = vmatpush.bf16.msra.mxu0 %v372
    %390 = vmatpush.bf16.msra.mxu0 %v371
    %391 = vmatpush.bf16.msra.mxu0 %v370
    %392 = vmatpush.bf16.msra.mxu0 %v369
    %393 = vmatmul.bf16.gmra.mxu0 %v316
    %v394 = vpop.f32.mrf.mxu0
    %v395 = vadd.f32 %v335, %v394
    %v396 = vpop.f32.mrf.mxu0
    %397 = vdwg.mxu0
    %vm398 = vcmask 66560
    %399 = vst.msk [vmem:[#allocation11] sm:$0x3] %vm398, %v395
    // Predicated region
    $region58: #{tpu_custom_call.1} parent=1 // pred_check
      _
    $region59: #{tpu_custom_call.1} parent=1 // pred_check_branch
      %401 = sbr.rel (0) target = $region61
    $region60: #{tpu_custom_call.1} parent=1 // pred_region
      %403 = vsyncadd [#allocation4], 0
      %s405 = sshll.u32 [#allocation11], 4
      %s406 = int_to_ptr.vmem [resolvable:$true] %s405
      %s407 = sshll.u32 %s9, 4
      %s408 = int_to_ptr.hbm [resolvable:$true] %s407
      %410 = dma.vmem_to_hbm [thread:$0]  %s406, 32, %s408, [#allocation4]
    $region61: #{tpu_custom_call.1} parent=1 // pred_fallthru
      _
    // Predicated region
    $region62: #{tpu_custom_call.1} parent=1 // pred_check
      _
    $region63: #{tpu_custom_call.1} parent=1 // pred_check_branch
      %412 = sbr.rel (0) target = $region65
    $region64: #{tpu_custom_call.1} parent=1 // pred_region
      %414 = dma.done [#allocation4], 32
    $region65: #{tpu_custom_call.1} parent=1 // pred_fallthru
      _
    %415 = vsyncpa [#allocation3], 1
    %416 = vsyncpa [#allocation6], 1
    %417 = vsyncpa [#allocation9], 1
    %418 = vsyncpa [#allocation4], 1

</llo_original>
